<compile_context>
chip_gen: v5e
topology: v5e:2x2
jax: 0.10.0
libtpu: 0.0.40
codegen_flags: <defaults>
</compile_context>

<pallas_src>
import math
import functools

import jax
import jax.numpy as jnp
import numpy as np
from jax.experimental import pallas as pl
from jax.experimental.pallas import tpu as pltpu

LN_EPS = 1e-5
_MIB = 1024 * 1024


def _layer_norm(x, gamma, beta, eps=LN_EPS):
    mean = jnp.mean(x, axis=-1, keepdims=True)
    var = jnp.mean((x - mean) ** 2, axis=-1, keepdims=True)
    return (x - mean) * jax.lax.rsqrt(var + eps) * gamma + beta


def _gelu_exact(x):
    # nn.GELU default = exact (erf) GELU -- used by the f32 reference.
    return 0.5 * x * (1.0 + jax.lax.erf(x * (1.0 / math.sqrt(2.0))))


def _pick_tile(n, candidates=(512, 256, 128, 64, 32, 16, 8)):
    """Largest tile from `candidates` dividing n, else n (full-extent block)."""
    for c in candidates:
        if n % c == 0:
            return c
    return n


def _row_tile(R, D):
    # Review: for D >= 1024 the resident bf16 MLP weights plus the (TR, 4D)
    # f32 GELU intermediate no longer fit v7x's 64 MiB/TC VMEM at TR=512, so
    # cap TR at 256 there.
    # TODO(synk): alternatively add a hidden-dim grid axis in Kernel C so
    # w1/w2 stream instead of staying fully resident.
    cap = 512 if D < 1024 else 256
    cands = tuple(c for c in (512, 256, 128, 64, 32, 16, 8) if c <= cap)
    return _pick_tile(R, cands)


def _attn_tiles(L, heads_per_block):
    # Cap TQ/TK at 256 and keep the two f32 (heads, TQ, TK) temporaries
    # (s and p) under ~4 MiB so they never blow the 64-vreg file / spill.
    cands = (256, 128, 64, 32, 16, 8)
    TQ = _pick_tile(L, cands)
    TK = _pick_tile(L, cands)
    budget = 4 * _MIB
    while (heads_per_block * TQ * TK * 4 * 2 > budget and TQ > 64
           and TQ % 2 == 0 and L % (TQ // 2) == 0):
        TQ //= 2
    return TQ, TK


def _vmem_limit(estimate_bytes):
    # ~30% headroom over the analytic footprint; floor 32 MiB (>= every chip's
    # scoped default), cap 64 MiB (<= physical VMEM on every chip incl. v7x).
    return int(min(max(int(estimate_bytes * 1.3), 32 * _MIB), 64 * _MIB))


def _const2d(a):
    # Grid-invariant (weight / bias / LN) block: loaded once, single-buffered
    # so large resident weights do not pay the 2x double-buffer VMEM tax.
    if hasattr(pl, "Buffered"):
        try:
            return pl.BlockSpec(a.shape, lambda *_: (0, 0),
                                pipeline_mode=pl.Buffered(1))
        except TypeError:   # older BlockSpec signature without pipeline_mode
            pass
    return pl.BlockSpec(a.shape, lambda *_: (0, 0))


# ---------------------------------------------------------------------------
# Kernel A: LN1 + fused QKV projection (row-tiled, lane-dense (TR, 3D) output)
# ---------------------------------------------------------------------------
def qkv_proj_kernel(x_ref, g1_ref, be1_ref, wqkv_ref, bqkv_ref, qkv_ref):
    x = x_ref[...].astype(jnp.float32)                      # (TR, D)
    xn = _layer_norm(x, g1_ref[...], be1_ref[...])
    qkv = jnp.dot(xn.astype(jnp.bfloat16), wqkv_ref[...],   # one wide MXU pass
                  preferred_element_type=jnp.float32) + bqkv_ref[...]
    qkv_ref[...] = qkv.astype(qkv_ref.dtype)


# ---------------------------------------------------------------------------
# Kernel B: flash attention (online softmax across kv tiles).
#   q/k/v blocks are (GH, tile, d) bf16 where GH = heads-per-block (num_heads
#   for the fallback layout, 1 for the zero-relayout head-grid-axis layout).
# ---------------------------------------------------------------------------
def flash_attn_kernel(q_ref, k_ref, v_ref, o_ref, m_sc, l_sc, acc_sc, *, kv_axis):
    ki = pl.program_id(kv_axis)

    @pl.when(ki == 0)
    def _():
        m_sc[...] = jnp.full(m_sc.shape, -jnp.inf, jnp.float32)
        l_sc[...] = jnp.zeros(l_sc.shape, jnp.float32)
        acc_sc[...] = jnp.zeros(acc_sc.shape, jnp.float32)

    q = q_ref[...]                                           # (GH, TQ, d) bf16, pre-scaled
    k = k_ref[...]                                           # (GH, TK, d) bf16
    v = v_ref[...]                                           # (GH, TK, d) bf16

    s = jnp.einsum("hqd,hkd->hqk", q, k,
                   preferred_element_type=jnp.float32)       # (GH, TQ, TK)
    m_new = jnp.maximum(m_sc[...], s.max(axis=-1, keepdims=True))
    alpha = jnp.exp(m_sc[...] - m_new)
    # TODO(synk): on v6e/v7x the EUP exp is the saturating slot for d=64; a
    # bf16 exp would ~double EUP throughput there, but v5e's EUP has no bf16
    # path and it compounds the softmax error -> kept in f32.
    p = jnp.exp(s - m_new)
    l_sc[...] = alpha * l_sc[...] + p.sum(axis=-1, keepdims=True)
    acc_sc[...] = alpha * acc_sc[...] + jnp.einsum(
        "hqk,hkd->hqd", p.astype(v.dtype), v,
        preferred_element_type=jnp.float32)
    m_sc[...] = m_new

    @pl.when(ki == pl.num_programs(kv_axis) - 1)
    def _():
        o = acc_sc[...] * pl.reciprocal(l_sc[...], approx=True)
        o_ref[...] = o.astype(o_ref.dtype)


# ---------------------------------------------------------------------------
# Kernel C: attn output projection + residual + LN2 + MLP(GELU) + residual
#   (row-tiled over the flattened (B*L, D) slab)
# ---------------------------------------------------------------------------
def proj_mlp_kernel(o_ref, x_ref, wp_ref, bp_ref, g2_ref, be2_ref,
                    w1_ref, b1_ref, w2_ref, b2_ref, out_ref):
    x = x_ref[...].astype(jnp.float32)                       # (TR, D)
    attn = jnp.dot(o_ref[...], wp_ref[...],                  # bf16 x bf16 -> f32
                   preferred_element_type=jnp.float32) + bp_ref[...]
    x1 = x + attn                                            # residual 1

    xn = _layer_norm(x1, g2_ref[...], be2_ref[...])
    h = jnp.dot(xn.astype(jnp.bfloat16), w1_ref[...],
                preferred_element_type=jnp.float32) + b1_ref[...]
    # Review: tanh-approx GELU lowers to the EUP slot instead of a long erf
    # VALU polynomial over the (TR, H) tile (max abs dev ~3e-3 vs exact GELU).
    h = jax.nn.gelu(h, approximate=True)
    y = jnp.dot(h.astype(jnp.bfloat16), w2_ref[...],
                preferred_element_type=jnp.float32) + b2_ref[...]
    out_ref[...] = (x1 + y).astype(out_ref.dtype)            # residual 2


# ---------------------------------------------------------------------------
# Attention dispatcher (zero-relayout path when head_dim % 128 == 0)
# ---------------------------------------------------------------------------
def _multihead_attention(qkv, B, L, D, num_heads):
    """qkv: (B*L, 3D) bf16 slab from Kernel A -> (B*L, D) bf16 attention out."""
    d = D // num_heads
    R = B * L

    def attn_vmem(GH, TQ, TK):
        return (2 * GH * TQ * d * 2            # q blocks (bf16, double-buffered)
                + 2 * 2 * GH * TK * d * 2      # k + v blocks
                + 2 * GH * TQ * d * 2          # o blocks
                + 2 * GH * TQ * 128 * 4        # m_sc + l_sc (lane-padded to 128)
                + GH * TQ * max(d, 128) * 4    # acc_sc
                + 2 * GH * TQ * TK * 4         # s and p f32 temporaries
                + GH * TQ * TK * 2)            # p bf16 cast for the pv matmul

    if d % 128 == 0:
        # Zero-relayout path: read q/k/v straight out of the (B, L, 3D) slab
        # via column block indices (q at block h, k at nH+h, v at 2nH+h) with
        # a head grid axis, and write o straight into its final (B, L, nH*d)
        # layout.  No XLA head transposes at all.
        TQ, TK = _attn_tiles(L, 1)
        qkv3 = qkv.reshape(B, L, 3 * D)
        o = pl.pallas_call(
            functools.partial(flash_attn_kernel, kv_axis=3),
            out_shape=jax.ShapeDtypeStruct((B, L, D), jnp.bfloat16),
            grid=(B, num_heads, L // TQ, L // TK),
            in_specs=[
                pl.BlockSpec((1, TQ, d), lambda b, h, qi, ki: (b, qi, h)),
                pl.BlockSpec((1, TK, d),
                             lambda b, h, qi, ki: (b, ki, num_heads + h)),
                pl.BlockSpec((1, TK, d),
                             lambda b, h, qi, ki: (b, ki, 2 * num_heads + h)),
            ],
            out_specs=pl.BlockSpec((1, TQ, d), lambda b, h, qi, ki: (b, qi, h)),
            scratch_shapes=[
                pltpu.VMEM((1, TQ, 1), jnp.float32),   # running max
                pltpu.VMEM((1, TQ, 1), jnp.float32),   # running denom
                pltpu.VMEM((1, TQ, d), jnp.float32),   # output accumulator
            ],
            compiler_params=pltpu.CompilerParams(
                dimension_semantics=("parallel", "parallel", "parallel",
                                     "arbitrary"),
                vmem_limit_bytes=_vmem_limit(attn_vmem(1, TQ, TK))),
        )(qkv3, qkv3, qkv3)
        return o.reshape(R, D)

    # Fallback for d not a multiple of 128 (cannot form a d-wide lane block):
    # ONE fused XLA relayout for q/k/v, heads batched as the leading dim of
    # every attention block.
    # TODO(synk): for d == 64 heads could be packed in pairs (2d == 128) to
    # take the zero-relayout path above.
    TQ, TK = _attn_tiles(L, num_heads)
    qkv_h = (qkv.reshape(B, L, 3, num_heads, d)
                .transpose(2, 0, 3, 1, 4)
                .reshape(3, B * num_heads, L, d))
    q, k, v = qkv_h[0], qkv_h[1], qkv_h[2]
    # TODO(synk): on v5e consider pipeline_mode=pl.Buffered(3) on the k/v
    # specs (deeper kv buffering) -- needs a runtime chip check.
    o = pl.pallas_call(
        functools.partial(flash_attn_kernel, kv_axis=2),
        out_shape=jax.ShapeDtypeStruct((B * num_heads, L, d), jnp.bfloat16),
        grid=(B, L // TQ, L // TK),
        in_specs=[
            pl.BlockSpec((num_heads, TQ, d), lambda b, qi, ki: (b, qi, 0)),
            pl.BlockSpec((num_heads, TK, d), lambda b, qi, ki: (b, ki, 0)),
            pl.BlockSpec((num_heads, TK, d), lambda b, qi, ki: (b, ki, 0)),
        ],
        out_specs=pl.BlockSpec((num_heads, TQ, d),
                               lambda b, qi, ki: (b, qi, 0)),
        scratch_shapes=[
            pltpu.VMEM((num_heads, TQ, 1), jnp.float32),
            pltpu.VMEM((num_heads, TQ, 1), jnp.float32),
            pltpu.VMEM((num_heads, TQ, d), jnp.float32),
        ],
        compiler_params=pltpu.CompilerParams(
            dimension_semantics=("parallel", "parallel", "arbitrary"),
            vmem_limit_bytes=_vmem_limit(attn_vmem(num_heads, TQ, TK))),
    )(q, k, v)
    return o.reshape(B, num_heads, L, d).transpose(0, 2, 1, 3).reshape(R, D)


# ---------------------------------------------------------------------------
# Wrapper
# ---------------------------------------------------------------------------
def self_attention_block(x, params, num_heads):
    B, L, D = x.shape
    assert D % num_heads == 0, "dim must be divisible by num_heads"
    d = D // num_heads
    scale = 1.0 / math.sqrt(d)
    R = B * L
    H = params["w1"].shape[1]

    # Fuse Q/K/V into one (D, 3D) weight; fold the softmax scale into Q;
    # store all matmul weights in HBM as bf16 (biases / LN params stay f32).
    wqkv = jnp.concatenate(
        [params["wq"] * scale, params["wk"], params["wv"]], axis=1
    ).astype(jnp.bfloat16)
    bqkv = jnp.concatenate(
        [params["bq"] * scale, params["bk"], params["bv"]], axis=1)
    wp = params["wp"].astype(jnp.bfloat16)
    w1 = params["w1"].astype(jnp.bfloat16)
    w2 = params["w2"].astype(jnp.bfloat16)

    TR = _row_tile(R, D)     # row tile for projection / MLP kernels
    x2 = x.reshape(R, D)

    # --- Kernel A: LN1 + fused QKV projection -----------------------------
    est_a = (2 * TR * D * 4                 # x tile (f32, double-buffered)
             + 2 * TR * 3 * D * 2           # qkv out tile (bf16, double-buffered)
             + D * 3 * D * 2                # wqkv bf16 (single-buffered)
             + 8 * 3 * D * 4                # bqkv / g1 / be1 (+ padding)
             + 2 * TR * 3 * D * 4           # f32 matmul result + cast headroom
             + TR * D * 4)                  # LN intermediate
    qkv = pl.pallas_call(
        qkv_proj_kernel,
        out_shape=jax.ShapeDtypeStruct((R, 3 * D), jnp.bfloat16),
        grid=(R // TR,),
        in_specs=[
            pl.BlockSpec((TR, D), lambda r: (r, 0)),
            _const2d(params["g1"]), _const2d(params["be1"]),
            _const2d(wqkv), _const2d(bqkv),
        ],
        out_specs=pl.BlockSpec((TR, 3 * D), lambda r: (r, 0)),
        compiler_params=pltpu.CompilerParams(
            dimension_semantics=("parallel",),
            vmem_limit_bytes=_vmem_limit(est_a)),
    )(x2, params["g1"], params["be1"], wqkv, bqkv)

    # --- Kernel B: flash attention -----------------------------------------
    o2 = _multihead_attention(qkv, B, L, D, num_heads)       # (R, D) bf16

    # --- Kernel C: proj + residual + LN2 + MLP + residual -------------------
    est_c = (2 * TR * D * 2                 # attention tile (bf16)
             + 2 * TR * D * 4               # x tile (f32)
             + 2 * TR * D * 4               # out tile (f32)
             + (D * D + 2 * D * H) * 2      # wp / w1 / w2 bf16 (single-buffered)
             + 8 * (3 * D + H) * 4          # biases + LN params (+ padding)
             + 2 * TR * H * 4               # (TR, H) GELU intermediate + temp
             + 3 * TR * D * 4)              # xn / attn / residual intermediates
    out = pl.pallas_call(
        proj_mlp_kernel,
        out_shape=jax.ShapeDtypeStruct((R, D), x.dtype),
        grid=(R // TR,),
        in_specs=[
            pl.BlockSpec((TR, D), lambda r: (r, 0)),    # attention heads
            pl.BlockSpec((TR, D), lambda r: (r, 0)),    # residual stream x
            _const2d(wp), _const2d(params["bp"]),
            _const2d(params["g2"]), _const2d(params["be2"]),
            _const2d(w1), _const2d(params["bm1"]),
            _const2d(w2), _const2d(params["bm2"]),
        ],
        out_specs=pl.BlockSpec((TR, D), lambda r: (r, 0)),
        compiler_params=pltpu.CompilerParams(
            dimension_semantics=("parallel",),
            vmem_limit_bytes=_vmem_limit(est_c)),
    )(o2, x2, wp, params["bp"], params["g2"], params["be2"],
      w1, params["bm1"], w2, params["bm2"])

    return out.reshape(B, L, D)


# ---------------------------------------------------------------------------
# Pure-JAX reference mirroring the PyTorch forward (f32 everywhere)
# ---------------------------------------------------------------------------
def reference_block(x, p, num_heads):
    B, L, D = x.shape
    d = D // num_heads

    def attn(xn):
        q = xn @ p["wq"] + p["bq"]
        k = xn @ p["wk"] + p["bk"]
        v = xn @ p["wv"] + p["bv"]
        qh = q.reshape(B, L, num_heads, d).transpose(0, 2, 1, 3)
        kh = k.reshape(B, L, num_heads, d).transpose(0, 2, 1, 3)
        vh = v.reshape(B, L, num_heads, d).transpose(0, 2, 1, 3)
        s = jnp.einsum("bhld,bhsd->bhls", qh, kh) / math.sqrt(d)
        a = jax.nn.softmax(s, axis=-1)
        o = jnp.einsum("bhls,bhsd->bhld", a, vh)
        o = o.transpose(0, 2, 1, 3).reshape(B, L, D)
        return o @ p["wp"] + p["bp"]

    xn = _layer_norm(x, p["g1"], p["be1"])
    x = x + attn(xn)
    xn = _layer_norm(x, p["g2"], p["be2"])
    h = _gelu_exact(xn @ p["w1"] + p["bm1"])
    x = x + (h @ p["w2"] + p["bm2"])
    return x


def init_params(key, dim, hidden):
    ks = jax.random.split(key, 8)
    s = 0.02
    f32 = jnp.float32
    return {
        "g1": jnp.ones((1, dim), f32), "be1": jnp.zeros((1, dim), f32),
        "wq": s * jax.random.normal(ks[0], (dim, dim), f32),
        "bq": jnp.zeros((1, dim), f32),
        "wk": s * jax.random.normal(ks[1], (dim, dim), f32),
        "bk": jnp.zeros((1, dim), f32),
        "wv": s * jax.random.normal(ks[2], (dim, dim), f32),
        "bv": jnp.zeros((1, dim), f32),
        "wp": s * jax.random.normal(ks[3], (dim, dim), f32),
        "bp": jnp.zeros((1, dim), f32),
        "g2": jnp.ones((1, dim), f32), "be2": jnp.zeros((1, dim), f32),
        "w1": s * jax.random.normal(ks[4], (dim, hidden), f32),
        "bm1": jnp.zeros((1, hidden), f32),
        "w2": s * jax.random.normal(ks[5], (hidden, dim), f32),
        "bm2": jnp.zeros((1, dim), f32),
    }


if __name__ == "__main__":
    key = jax.random.PRNGKey(0)
    kx, kp, kx2, kp2 = jax.random.split(key, 4)

    # TODO(synk): t_idx / attn_mask / pos_bias / is_causal / dropout paths are
    # not exercised (module defaults in eval mode make them identity / None).

    # --- Test 1: small shapes (head_dim = 8 -> fused-relayout fallback path)
    B, L, D = 2, 8, 32
    num_heads = 4
    H = int(D * 4.0)
    x = jax.random.normal(kx, (B, L, D), jnp.float32)
    params = init_params(kp, D, H)
    out = jax.block_until_ready(self_attention_block(x, params, num_heads))
    ref = reference_block(x, params, num_heads)
    np.testing.assert_allclose(np.asarray(out), np.asarray(ref),
                               rtol=2e-2, atol=2e-2)

    # --- Test 2: head_dim = 128 -> zero-relayout attention path -------------
    B2, L2, D2, nH2 = 1, 256, 256, 2
    H2 = int(D2 * 4.0)
    x_b = jax.random.normal(kx2, (B2, L2, D2), jnp.float32)
    params2 = init_params(kp2, D2, H2)
    out2 = jax.block_until_ready(self_attention_block(x_b, params2, nH2))
    ref2 = reference_block(x_b, params2, nH2)
    np.testing.assert_allclose(np.asarray(out2), np.asarray(ref2),
                               rtol=3e-2, atol=3e-2)

    print("KERNEL_OK")
</pallas_src>

<mosaic_0001>
module attributes {stable_mosaic.version = 11 : i64} {
  func.func @qkv_proj_kernel(%arg0: i32, %arg1: memref<16x32xf32, #tpu.memory_space<vmem>>, %arg2: memref<1x32xf32, #tpu.memory_space<vmem>>, %arg3: memref<1x32xf32, #tpu.memory_space<vmem>>, %arg4: memref<32x96xbf16, #tpu.memory_space<vmem>>, %arg5: memref<1x96xf32, #tpu.memory_space<vmem>>, %arg6: memref<16x96xbf16, #tpu.memory_space<vmem>>) attributes {dimension_semantics = [#tpu.dimension_semantics<parallel>], iteration_bounds = array<i64: 1>, scalar_prefetch = 0 : i64, scratch_operands = 0 : i64, tpu.core_type = #tpu.core_type<tc>, window_params = [{transform_indices = @transform_0, window_bounds = array<i64: 16, 32>}, {pipeline_mode = #tpu.pipeline_mode<synchronous>, transform_indices = @transform_1, window_bounds = array<i64: 1, 32>}, {pipeline_mode = #tpu.pipeline_mode<synchronous>, transform_indices = @transform_2, window_bounds = array<i64: 1, 32>}, {pipeline_mode = #tpu.pipeline_mode<synchronous>, transform_indices = @transform_3, window_bounds = array<i64: 32, 96>}, {pipeline_mode = #tpu.pipeline_mode<synchronous>, transform_indices = @transform_4, window_bounds = array<i64: 1, 96>}, {transform_indices = @transform_5, window_bounds = array<i64: 16, 96>}]} {
    %c0 = arith.constant 0 : index
    %c0_0 = arith.constant 0 : index
    %0 = vector.load %arg1[%c0, %c0_0] : memref<16x32xf32, #tpu.memory_space<vmem>>, vector<16x32xf32>
    %c0_1 = arith.constant 0 : index
    %c0_2 = arith.constant 0 : index
    %1 = vector.load %arg2[%c0_1, %c0_2] : memref<1x32xf32, #tpu.memory_space<vmem>>, vector<1x32xf32>
    %c0_3 = arith.constant 0 : index
    %c0_4 = arith.constant 0 : index
    %2 = vector.load %arg3[%c0_3, %c0_4] : memref<1x32xf32, #tpu.memory_space<vmem>>, vector<1x32xf32>
    %cst = arith.constant dense<0.000000e+00> : vector<16xf32>
    %3 = vector.multi_reduction <add>, %0, %cst [1] : vector<16x32xf32> to vector<16xf32>
    %4 = vector.shape_cast %3 : vector<16xf32> to vector<16x1xf32>
    %cst_5 = arith.constant 3.200000e+01 : f32
    %5 = vector.broadcast %cst_5 : f32 to vector<16x1xf32>
    %6 = arith.divf %4, %5 : vector<16x1xf32>
    %7 = vector.broadcast %6 : vector<16x1xf32> to vector<16x32xf32>
    %8 = arith.subf %0, %7 : vector<16x32xf32>
    %9 = arith.mulf %8, %8 : vector<16x32xf32>
    %cst_6 = arith.constant dense<0.000000e+00> : vector<16xf32>
    %10 = vector.multi_reduction <add>, %9, %cst_6 [1] : vector<16x32xf32> to vector<16xf32>
    %11 = vector.shape_cast %10 : vector<16xf32> to vector<16x1xf32>
    %cst_7 = arith.constant 3.200000e+01 : f32
    %12 = vector.broadcast %cst_7 : f32 to vector<16x1xf32>
    %13 = arith.divf %11, %12 : vector<16x1xf32>
    %14 = vector.broadcast %6 : vector<16x1xf32> to vector<16x32xf32>
    %15 = arith.subf %0, %14 : vector<16x32xf32>
    %cst_8 = arith.constant 9.99999974E-6 : f32
    %16 = vector.broadcast %cst_8 : f32 to vector<16x1xf32>
    %17 = arith.addf %13, %16 : vector<16x1xf32>
    %18 = math.rsqrt %17 : vector<16x1xf32>
    %19 = vector.broadcast %18 : vector<16x1xf32> to vector<16x32xf32>
    %20 = arith.mulf %15, %19 : vector<16x32xf32>
    %21 = vector.broadcast %1 : vector<1x32xf32> to vector<16x32xf32>
    %22 = arith.mulf %20, %21 : vector<16x32xf32>
    %23 = vector.broadcast %2 : vector<1x32xf32> to vector<16x32xf32>
    %24 = arith.addf %22, %23 : vector<16x32xf32>
    %25 = arith.truncf %24 : vector<16x32xf32> to vector<16x32xbf16>
    %c0_9 = arith.constant 0 : index
    %c0_10 = arith.constant 0 : index
    %26 = vector.load %arg4[%c0_9, %c0_10] : memref<32x96xbf16, #tpu.memory_space<vmem>>, vector<32x96xbf16>
    %cst_11 = arith.constant dense<0.000000e+00> : vector<16x96xf32>
    %27 = tpu.matmul %25, %26, %cst_11 {dimension_numbers = #tpu.dot_dimension_numbers<[1], [0], [0], [1], [0, 0, 1, 1], [], []>} : vector<16x32xbf16>, vector<32x96xbf16>, vector<16x96xf32> -> vector<16x96xf32>
    %c0_12 = arith.constant 0 : index
    %c0_13 = arith.constant 0 : index
    %28 = vector.load %arg5[%c0_12, %c0_13] : memref<1x96xf32, #tpu.memory_space<vmem>>, vector<1x96xf32>
    %29 = vector.broadcast %28 : vector<1x96xf32> to vector<16x96xf32>
    %30 = arith.addf %27, %29 : vector<16x96xf32>
    %31 = arith.truncf %30 : vector<16x96xf32> to vector<16x96xbf16>
    %c0_14 = arith.constant 0 : index
    %c0_15 = arith.constant 0 : index
    %32 = vector.load %arg6[%c0_14, %c0_15] : memref<16x96xbf16, #tpu.memory_space<vmem>>, vector<16x96xbf16>
    tpu.vector_store %arg6[%c0_14, %c0_15], %31 {strides = array<i32>} : memref<16x96xbf16, #tpu.memory_space<vmem>>, vector<16x96xbf16>,
    return
  }
  func.func @transform_0(%arg0: i32) -> (i32, i32) {
    %c0_i32 = arith.constant 0 : i32
    %c0_i32_0 = arith.constant 0 : i32
    return %arg0, %c0_i32 : i32, i32
  }
  func.func @transform_1(%arg0: i32) -> (i32, i32) {
    %c0_i32 = arith.constant 0 : i32
    %c0_i32_0 = arith.constant 0 : i32
    %c0_i32_1 = arith.constant 0 : i32
    return %c0_i32, %c0_i32_0 : i32, i32
  }
  func.func @transform_2(%arg0: i32) -> (i32, i32) {
    %c0_i32 = arith.constant 0 : i32
    %c0_i32_0 = arith.constant 0 : i32
    %c0_i32_1 = arith.constant 0 : i32
    return %c0_i32, %c0_i32_0 : i32, i32
  }
  func.func @transform_3(%arg0: i32) -> (i32, i32) {
    %c0_i32 = arith.constant 0 : i32
    %c0_i32_0 = arith.constant 0 : i32
    %c0_i32_1 = arith.constant 0 : i32
    return %c0_i32, %c0_i32_0 : i32, i32
  }
  func.func @transform_4(%arg0: i32) -> (i32, i32) {
    %c0_i32 = arith.constant 0 : i32
    %c0_i32_0 = arith.constant 0 : i32
    %c0_i32_1 = arith.constant 0 : i32
    return %c0_i32, %c0_i32_0 : i32, i32
  }
  func.func @transform_5(%arg0: i32) -> (i32, i32) {
    %c0_i32 = arith.constant 0 : i32
    %c0_i32_0 = arith.constant 0 : i32
    return %arg0, %c0_i32 : i32, i32
  }
}

</mosaic_0001>

<llo_original>
// kernel: tpu_custom_call.1
$region0: #{tpu_custom_call.1}
  #allocation0 [shape = 'u32[]', space=smem, size = 0x4, offset = 0x4, fixed_abs, tag = 'smem constant byte address 0x4 - core index']
  #allocation1 [shape = 'u32[72,128]{1,0:T(1,128)}', space=vmem, size = 0x9000, scoped, tag = 'internal scratch']
  %s0 = inlined_call_operand.hbm [shape: f32[16,32], index: 0, kind: input, shape index: {}]
  %s1 = inlined_call_operand.hbm [shape: f32[1,32], index: 1, kind: input, shape index: {}]
  %s2 = inlined_call_operand.vmem [shape: f32[1,32], index: 2, kind: input, shape index: {}]
  %s3 = inlined_call_operand.hbm [shape: bf16[32,96], index: 3, kind: input, shape index: {}]
  %s4 = inlined_call_operand.vmem [shape: f32[1,96], index: 4, kind: input, shape index: {}]
  %s5 = inlined_call_operand.hbm [shape: bf16[16,96], index: 5, kind: output, shape index: {}]
  %s6 = sld [smem:[#allocation0]]
  $region42: #{tpu_custom_call.1} parent=0
    _
  %s8 = ssub.s32 1, %s6
  %s9 = scalar_select 0, %s8, %s6
  $region1: #{tpu_custom_call.1} parent=0
    #allocation2 [shape = 'u8[8192]{0}', space=vmem, size = 0x2000, scoped, tag = 'input window, operand 0, single buffered']
    #allocation3 [shape = 's32[1]{0}', space=sflag, size = 0x4, scoped, tag = 'scoped memory for tpu_custom_call.1']
    #allocation4 [shape = 's32[1]{0}', space=sflag, size = 0x4, scoped, tag = 'scoped memory for tpu_custom_call.1']
    #allocation5 [shape = 'u8[512]{0}', space=vmem, size = 0x400, scoped, tag = 'input window, operand 1, single buffered']
    #allocation6 [shape = 's32[1]{0}', space=sflag, size = 0x4, scoped, tag = 'scoped memory for tpu_custom_call.1']
    #allocation7 [shape = 'u8[8192]{0}', space=vmem, size = 0x2000, scoped, tag = 'input window, operand 3, single buffered']
    #allocation8 [shape = 'u8[4096]{0}', space=vmem, size = 0x1000, scoped, tag = 'output window, operand 0, single buffered']
    %10 = vsyncpa [#allocation3], 0
    %11 = vsyncpa [#allocation6], 0
    %12 = vsyncpa [#allocation4], 0
    // Predicated region
    $region2: #{tpu_custom_call.1} parent=1 // pred_check
      _
    $region3: #{tpu_custom_call.1} parent=1 // pred_check_branch
      %14 = sbr.rel (0) target = $region5
    $region4: #{tpu_custom_call.1} parent=1 // pred_region
      %16 = vsyncadd [#allocation3], 0
      %s17 = sshll.u32 %s0, 4
      %s18 = int_to_ptr.hbm [resolvable:$true] %s17
      %s19 = sshll.u32 [#allocation2], 4
      %s20 = int_to_ptr.vmem [resolvable:$true] %s19
      %25 = dma.hbm_to_vmem [thread:$0]  %s18, 256, %s20, [#allocation3], 128, 128, 8
    $region5: #{tpu_custom_call.1} parent=1 // pred_fallthru
      _
    // Predicated region
    $region6: #{tpu_custom_call.1} parent=1 // pred_check
      _
    $region7: #{tpu_custom_call.1} parent=1 // pred_check_branch
      %27 = sbr.rel (0) target = $region9
    $region8: #{tpu_custom_call.1} parent=1 // pred_region
      %29 = vsyncadd [#allocation6], 0
      %s31 = sshll.u32 %s1, 4
      %s32 = int_to_ptr.hbm [resolvable:$true] %s31
      %s33 = sshll.u32 [#allocation5], 4
      %s34 = int_to_ptr.vmem [resolvable:$true] %s33
      %36 = dma.hbm_to_vmem [thread:$0]  %s32, 16, %s34, [#allocation6]
    $region9: #{tpu_custom_call.1} parent=1 // pred_fallthru
      _
    // Predicated region
    $region10: #{tpu_custom_call.1} parent=1 // pred_check
      _
    $region11: #{tpu_custom_call.1} parent=1 // pred_check_branch
      %38 = sbr.rel (0) target = $region13
    $region12: #{tpu_custom_call.1} parent=1 // pred_region
      _
    $region13: #{tpu_custom_call.1} parent=1 // pred_fallthru
      _
    // Predicated region
    $region14: #{tpu_custom_call.1} parent=1 // pred_check
      _
    $region15: #{tpu_custom_call.1} parent=1 // pred_check_branch
      %40 = sbr.rel (0) target = $region17
    $region16: #{tpu_custom_call.1} parent=1 // pred_region
      %42 = vsyncadd [#allocation6], 0
      %s43 = sshll.u32 %s3, 4
      %s44 = int_to_ptr.hbm [resolvable:$true] %s43
      %s45 = sshll.u32 [#allocation7], 4
      %s46 = int_to_ptr.vmem [resolvable:$true] %s45
      %51 = dma.hbm_to_vmem [thread:$0]  %s44, 256, %s46, [#allocation6], 64, 64, 4
    $region17: #{tpu_custom_call.1} parent=1 // pred_fallthru
      _
    // Predicated region
    $region18: #{tpu_custom_call.1} parent=1 // pred_check
      _
    $region19: #{tpu_custom_call.1} parent=1 // pred_check_branch
      %53 = sbr.rel (0) target = $region21
    $region20: #{tpu_custom_call.1} parent=1 // pred_region
      _
    $region21: #{tpu_custom_call.1} parent=1 // pred_fallthru
      _
    // Predicated region
    $region22: #{tpu_custom_call.1} parent=1 // pred_check
      _
    $region23: #{tpu_custom_call.1} parent=1 // pred_check_branch
      %55 = sbr.rel (0) target = $region25
    $region24: #{tpu_custom_call.1} parent=1 // pred_region
      %57 = dma.done [#allocation3], 256
    $region25: #{tpu_custom_call.1} parent=1 // pred_fallthru
      _
    // Predicated region
    $region26: #{tpu_custom_call.1} parent=1 // pred_check
      _
    $region27: #{tpu_custom_call.1} parent=1 // pred_check_branch
      %59 = sbr.rel (0) target = $region29
    $region28: #{tpu_custom_call.1} parent=1 // pred_region
      %61 = dma.done [#allocation6], 16
    $region29: #{tpu_custom_call.1} parent=1 // pred_fallthru
      _
    // Predicated region
    $region30: #{tpu_custom_call.1} parent=1 // pred_check
      _
    $region31: #{tpu_custom_call.1} parent=1 // pred_check_branch
      %63 = sbr.rel (0) target = $region33
    $region32: #{tpu_custom_call.1} parent=1 // pred_region
      %65 = dma.done [#allocation6], 256
    $region33: #{tpu_custom_call.1} parent=1 // pred_fallthru
      _
    %v67 = vld [vmem:[#allocation2] sm:$0xff]
    %v68 = vld [vmem:[#allocation2 + $0x8] sm:$0xff]
    %v69 = vld [vmem:[#allocation5] sm:$0x1]
    %v70 = vld [vmem:[%s2] sm:$0x1]
    %vm71 = vcmask 261120
    %v72 = vsel %vm71, %v67, 0.0
    %73 = vadd.xlane.f32.xlu0 %v72
    %v74 = vpop.xlane.xlu0 %73
    %v75 = vsel %vm71, %v68, 0.0
    %76 = vadd.xlane.f32.xlu0 %v75
    %v77 = vpop.xlane.xlu0 %76
    %v78 = vrcp.pop 32.0
    %v79 = vmul.f32 32.0, %v78
    %v80 = vsub.f32 1.0, %v79
    %v81 = vmul.f32 %v78, %v80
    %v82 = vadd.f32 %v78, %v81
    %vm83 = vweird.f32 %v78
    %v84 = vsel %vm83, %v78, %v82
    %v85 = vmul.f32 %v74, %v84
    %v86 = vmul.f32 %v77, %v84
    %v87 = vsub.f32 %v67, %v85
    %v88 = vsub.f32 %v68, %v86
    %v89 = vmul.f32 %v87, %v87
    %v90 = vmul.f32 %v88, %v88
    %v91 = vsel %vm71, %v89, 0.0
    %92 = vadd.xlane.f32.xlu0 %v91
    %v93 = vpop.xlane.xlu0 %92
    %v94 = vsel %vm71, %v90, 0.0
    %95 = vadd.xlane.f32.xlu0 %v94
    %v96 = vpop.xlane.xlu0 %95
    %v97 = vmul.f32 %v93, %v84
    %v98 = vmul.f32 %v96, %v84
    %v99 = vadd.f32 %v97, 1e-05
    %v100 = vadd.f32 %v98, 1e-05
    %v101 = vrsqrt.pop %v99
    %v102 = vmul.f32 %v101, %v99
    %v103 = vmul.f32 %v102, %v101
    %v104 = vmul.f32 0.5, %v103
    %v105 = vsub.f32 1.5, %v104
    %v106 = vmul.f32 %v101, %v105
    %vm107 = vweird.f32 %v99
    %vm108 = vweird.f32 %v101
    %vm109 = vmor %vm107, %vm108
    %v110 = vsel %vm109, %v101, %v106
    %v111 = vrsqrt.pop %v100
    %v112 = vmul.f32 %v111, %v100
    %v113 = vmul.f32 %v112, %v111
    %v114 = vmul.f32 0.5, %v113
    %v115 = vsub.f32 1.5, %v114
    %v116 = vmul.f32 %v111, %v115
    %vm117 = vweird.f32 %v100
    %vm118 = vweird.f32 %v111
    %vm119 = vmor %vm117, %vm118
    %v120 = vsel %vm119, %v111, %v116
    %v121 = vmul.f32 %v87, %v110
    %v122 = vmul.f32 %v88, %v120
    %v124 = vperm.slane %v69, 0
    %v126 = vmul.f32 %v121, %v124
    %v127 = vmul.f32 %v122, %v124
    %v129 = vperm.slane %v70, 0
    %v131 = vadd.f32 %v126, %v129
    %v132 = vadd.f32 %v127, %v129
    %v133 = vpack.c.bf16 %v132, %v131
    %v134 = vld [vmem:[#allocation7] sm:$0xf]
    %v135 = vld [vmem:[#allocation7 + $0x4] sm:$0xf]
    %v136 = vld [vmem:[#allocation7 + $0x8] sm:$0xf]
    %v137 = vld [vmem:[#allocation7 + $0xc] sm:$0xf]
    %v138 = vld [vmem:[%s4] sm:$0x1]
    %v140 = vperm.slane %v138, 0
    %v146 = vunpack.c.l.b16 %v134
    %v147 = vunpack.c.l.b16 %v135
    %v148 = vunpack.c.l.b16 %v136
    %v149 = vunpack.c.l.b16 %v137
    %v150 = vpack.c.b16 %v147, %v146
    %v151 = vpack.c.b16 %v149, %v148
    %v155 = vsel %vm71, %v133, 0
    %157 = vmatpush.bf16.msra.mxu0 0
    %158 = vmatpush.bf16.msra.mxu0 0
    %159 = vmatpush.bf16.msra.mxu0 0
    %160 = vmatpush.bf16.msra.mxu0 0
    %161 = vmatpush.bf16.msra.mxu0 0
    %162 = vmatpush.bf16.msra.mxu0 0
    %163 = vmatpush.bf16.msra.mxu0 %v151
    %164 = vmatpush.bf16.msra.mxu0 %v150
    %165 = vmatmul.bf16.gmra.mxu0 %v155
    %v166 = vpop.f32.mrf.mxu0
    %v167 = vadd.f32 %v140, %v166
    %v168 = vpop.f32.mrf.mxu0
    %v169 = vadd.f32 %v140, %v168
    %170 = vdwg.mxu0
    %v171 = vpack.c.bf16 %v167, %v167
    %v172 = vpack.c.bf16 %v169, %v169
    %vm173 = vcmask 781312
    %174 = vst.msk [vmem:[#allocation8] sm:$0xf] %vm173, %v171
    %175 = vst.msk [vmem:[#allocation8 + $0x4] sm:$0xf] %vm173, %v172
    // Predicated region
    $region34: #{tpu_custom_call.1} parent=1 // pred_check
      _
    $region35: #{tpu_custom_call.1} parent=1 // pred_check_branch
      %177 = sbr.rel (0) target = $region37
    $region36: #{tpu_custom_call.1} parent=1 // pred_region
      %179 = vsyncadd [#allocation4], 0
      %s180 = sshll.u32 [#allocation8], 4
      %s181 = int_to_ptr.vmem [resolvable:$true] %s180
      %s182 = sshll.u32 %s5, 4
      %s183 = int_to_ptr.hbm [resolvable:$true] %s182
      %188 = dma.vmem_to_hbm [thread:$0]  %s181, 128, %s183, [#allocation4], 64, 64, 4
    $region37: #{tpu_custom_call.1} parent=1 // pred_fallthru
      _
    // Predicated region
    $region38: #{tpu_custom_call.1} parent=1 // pred_check
      _
    $region39: #{tpu_custom_call.1} parent=1 // pred_check_branch
      %190 = sbr.rel (0) target = $region41
    $region40: #{tpu_custom_call.1} parent=1 // pred_region
      %192 = dma.done [#allocation4], 128
    $region41: #{tpu_custom_call.1} parent=1 // pred_fallthru
      _
    %193 = vsyncpa [#allocation3], 1
    %194 = vsyncpa [#allocation6], 1
    %195 = vsyncpa [#allocation4], 1

</llo_original>
